<compile_context>
chip_gen: v6e
topology: v6e:2x2x1
jax: 0.10.0
libtpu: 0.0.40
codegen_flags: <defaults>
</compile_context>

<pallas_src>
import jax
import jax.numpy as jnp
from jax.experimental import pallas as pl
from jax.experimental.pallas import tpu as pltpu

_MiB = 1024 * 1024


def _round_up(x, m):
    return (x + m - 1) // m * m


def _vmem_capacity_bytes():
    """Physical VMEM per core; fall back to the smallest (v7x, 64 MiB) if unknown."""
    try:
        return int(pltpu.get_tpu_info().vmem_capacity_bytes)
    except Exception:
        return 64 * _MiB


def _make_frnorm_kernel(inv_hw, low_precision_affine):
    """Main kernel: one whole (R, HW) row strip resident per grid step."""

    def kernel(eps_ref, x_ref, w_ref, b_ref, o_ref):
        # x_ref: (R, HW); w_ref/b_ref: (R, 1) f32; eps_ref: (1,) SMEM (= |eps|).
        x = x_ref[...]
        xf = x.astype(jnp.float32)                                 # f32 reduce
        nu2 = jnp.sum(xf * xf, axis=-1, keepdims=True) * inv_hw    # (R, 1)
        scale = w_ref[...] * jax.lax.rsqrt(nu2 + eps_ref[0])       # (R, 1) f32
        if low_precision_affine:
            # bf16 affine pass (v6e/v7x): halves VALU slot pressure, no f32 tile temp.
            o_ref[...] = x * scale.astype(x.dtype) + b_ref[...].astype(x.dtype)
        else:
            o_ref[...] = (xf * scale + b_ref[...]).astype(o_ref.dtype)

    return kernel


def _make_frnorm_chunked_kernel(inv_hw, hw, chunk, low_precision_affine):
    """Two-pass fallback for very large H*W: grid (row_blocks, 2, hw_chunks).

    Pass p=0 accumulates sum(x^2) per row into f32 VMEM scratch; pass p=1
    re-reads each chunk, normalizes and writes it.  Costs one extra input read
    (3 HBM passes total) but bounds VMEM to a (R, chunk) strip.
    """
    need_mask = (hw % chunk) != 0

    def kernel(eps_ref, x_ref, w_ref, b_ref, o_ref, acc_ref):
        p = pl.program_id(1)
        c = pl.program_id(2)

        @pl.when((p == 0) & (c == 0))
        def _():
            acc_ref[...] = jnp.zeros_like(acc_ref)

        @pl.when(p == 0)
        def _():
            xf = x_ref[...].astype(jnp.float32)
            xsq = xf * xf
            if need_mask:
                # Last chunk is a partial block: OOB lanes are undefined -> mask.
                lane = jax.lax.broadcasted_iota(jnp.int32, xsq.shape, 1) + c * chunk
                xsq = jnp.where(lane < hw, xsq, 0.0)
            acc_ref[...] += jnp.sum(xsq, axis=-1, keepdims=True)

        @pl.when(p == 1)
        def _():
            nu2 = acc_ref[...] * inv_hw
            scale = w_ref[...] * jax.lax.rsqrt(nu2 + eps_ref[0])
            x = x_ref[...]
            if low_precision_affine:
                o_ref[...] = x * scale.astype(x.dtype) + b_ref[...].astype(x.dtype)
            else:
                o_ref[...] = (x.astype(jnp.float32) * scale
                              + b_ref[...]).astype(o_ref.dtype)

    return kernel


def frnorm2d(x, weight, bias, eps, *, target_block_bytes=None, force_hw_chunk=None):
    """FRNorm2D forward. x: (N, C, H, W); weight/bias: (1, C, 1, 1); eps: (1,)."""
    N, C, H, W = x.shape
    HW = H * W
    NC = N * C
    itemsize = jnp.dtype(x.dtype).itemsize
    HWp = _round_up(HW, 128)               # VMEM layout width (accounting only)

    # ---- generation-aware budgets ------------------------------------------
    vmem_cap = _vmem_capacity_bytes()
    # ~half of physical VMEM: 64 MiB on v5e/v6e (128 MiB), 32 MiB on v7x (64 MiB).
    vmem_cap_limit = min(vmem_cap // 2, 64 * _MiB)
    if target_block_bytes is None:
        target_block_bytes = 6 * _MiB if vmem_cap >= 100 * _MiB else 3 * _MiB
    budget = vmem_cap_limit - 2 * _MiB

    # bf16: keep the reduction in f32, run the affine pass in bf16.
    # (On v5e, which lacks bf16 VALU, the f32 path would be preferred.)
    low_precision_affine = x.dtype == jnp.bfloat16

    # ---- zero-copy reshapes & tiny per-row params ---------------------------
    x2 = x.reshape(NC, HW)                                  # contiguous: free
    w_rows = jnp.broadcast_to(weight.reshape(1, C), (N, C)).reshape(NC, 1)
    b_rows = jnp.broadcast_to(bias.reshape(1, C), (N, C)).reshape(NC, 1)
    w_rows = w_rows.astype(jnp.float32)
    b_rows = b_rows.astype(jnp.float32)
    eps_abs = jnp.abs(eps).astype(jnp.float32)              # torch eps.abs(), hoisted
    inv_hw = 1.0 / float(HW)

    # Per-row VMEM of a resident strip: double-buffered in + out blocks plus the
    # in-kernel f32 temporaries (x.astype(f32), x*x).
    per_row_vmem = HWp * (4 * itemsize + 8)
    r_vmem = (budget // per_row_vmem) // 8 * 8

    use_chunked = (force_hw_chunk is not None) or (r_vmem < 8)

    if not use_chunked:
        # ---- main path: one (R, HW) strip per grid step ---------------------
        if NC < 8:
            R = NC                                          # block == full row dim
        else:
            r_target = max(8, (target_block_bytes // (HWp * itemsize)) // 8 * 8)
            R = min(r_target, r_vmem, max(8, NC // 8 * 8))
            if NC >= 64:                                    # keep >= ~8 grid steps
                R = min(R, max(8, (NC // 8) // 8 * 8))
            R = max(R, 8)
        grid = (pl.cdiv(NC, R),)

        vmem_needed = (R * HWp * (4 * itemsize + 8)         # in/out dbl-buf + f32 temps
                       + 4 * R * 128 * 4                    # (R,1) param tiles
                       + 2 * _MiB)
        vmem_limit = int(min(max(vmem_needed, 16 * _MiB), vmem_cap_limit))

        kernel = _make_frnorm_kernel(inv_hw, low_precision_affine)
        # NOTE: if xprof shows exposed DMA between steps, the x/out BlockSpecs can
        # take pipeline_mode=pl.Buffered(3) (costs one extra block of VMEM).
        out = pl.pallas_call(
            kernel,
            out_shape=jax.ShapeDtypeStruct((NC, HW), x.dtype),
            grid_spec=pltpu.PrefetchScalarGridSpec(
                num_scalar_prefetch=0,
                grid=grid,
                in_specs=[
                    pl.BlockSpec(memory_space=pltpu.SMEM),      # |eps| scalar
                    pl.BlockSpec((R, HW), lambda i: (i, 0)),    # x rows
                    pl.BlockSpec((R, 1), lambda i: (i, 0)),     # weight rows
                    pl.BlockSpec((R, 1), lambda i: (i, 0)),     # bias rows
                ],
                out_specs=pl.BlockSpec((R, HW), lambda i: (i, 0)),
            ),
            compiler_params=pltpu.CompilerParams(
                dimension_semantics=("parallel",),
                vmem_limit_bytes=vmem_limit,
            ),
        )(eps_abs, x2, w_rows, b_rows)
        return out.reshape(N, C, H, W)

    # ---- fallback path: chunked two-pass reduction over H*W ------------------
    R = NC if NC < 8 else 8
    if force_hw_chunk is not None:
        CHUNK = int(force_hw_chunk)
    else:
        CHUNK = (target_block_bytes // (max(R, 1) * itemsize)) // 128 * 128
        CHUNK = min(CHUNK, (budget // (max(R, 1) * (4 * itemsize + 8))) // 128 * 128)
    CHUNK = max(128, min(CHUNK, HWp))
    n_chunks = pl.cdiv(HW, CHUNK)
    grid = (pl.cdiv(NC, R), 2, n_chunks)

    vmem_needed = R * CHUNK * (4 * itemsize + 8) + 5 * R * 128 * 4 + 2 * _MiB
    vmem_limit = int(min(max(vmem_needed, 16 * _MiB), vmem_cap_limit))

    kernel = _make_frnorm_chunked_kernel(inv_hw, HW, CHUNK, low_precision_affine)
    out = pl.pallas_call(
        kernel,
        out_shape=jax.ShapeDtypeStruct((NC, HW), x.dtype),
        grid_spec=pltpu.PrefetchScalarGridSpec(
            num_scalar_prefetch=0,
            grid=grid,
            in_specs=[
                pl.BlockSpec(memory_space=pltpu.SMEM),                 # |eps|
                pl.BlockSpec((R, CHUNK), lambda i, p, c: (i, c)),      # x chunks
                pl.BlockSpec((R, 1), lambda i, p, c: (i, 0)),          # weight
                pl.BlockSpec((R, 1), lambda i, p, c: (i, 0)),          # bias
            ],
            # p=0: keep block (i,0) resident (never written); p=1: write (i,c).
            out_specs=pl.BlockSpec((R, CHUNK), lambda i, p, c: (i, p * c)),
            scratch_shapes=[pltpu.VMEM((R, 1), jnp.float32)],
        ),
        compiler_params=pltpu.CompilerParams(
            dimension_semantics=("parallel", "arbitrary", "arbitrary"),
            vmem_limit_bytes=vmem_limit,
        ),
    )(eps_abs, x2, w_rows, b_rows)
    return out.reshape(N, C, H, W)


def frnorm2d_ref(x, weight, bias, eps):
    xf = x.astype(jnp.float32)
    nu2 = jnp.mean(xf * xf, axis=(2, 3), keepdims=True)
    xn = xf * jax.lax.rsqrt(nu2 + jnp.abs(eps).astype(jnp.float32).reshape(1, 1, 1, 1))
    y = weight.astype(jnp.float32) * xn + bias.astype(jnp.float32)
    return y.astype(x.dtype)


if __name__ == "__main__":
    key = jax.random.PRNGKey(0)
    k1, k2, k3 = jax.random.split(key, 3)

    # Case 1: module-default init (weight=1, bias=0, eps=1e-6), aligned HW=256.
    N, C, H, W = 2, 4, 16, 16
    x = jax.random.normal(k1, (N, C, H, W), dtype=jnp.float32)
    weight = jnp.ones((1, C, 1, 1), jnp.float32)      # nn.init.ones_
    bias = jnp.zeros((1, C, 1, 1), jnp.float32)       # nn.init.zeros_
    eps = jnp.full((1,), 1e-6, jnp.float32)           # nn.init.constant_ 1e-6
    out = jax.block_until_ready(frnorm2d(x, weight, bias, eps))
    ref = frnorm2d_ref(x, weight, bias, eps)
    assert out.shape == ref.shape
    assert jnp.allclose(out, ref, atol=1e-5, rtol=1e-5)

    # Case 2: ragged spatial size (H*W = 49) — exercises the unpadded minor dim
    # and masked lane-tail stores (no wrapper pad/slice HBM copies anymore).
    N2, C2, H2, W2 = 2, 8, 7, 7
    x2 = jax.random.normal(k2, (N2, C2, H2, W2), dtype=jnp.float32)
    w2 = 0.5 + 0.1 * jnp.arange(C2, dtype=jnp.float32).reshape(1, C2, 1, 1)
    b2 = 0.01 * jnp.arange(C2, dtype=jnp.float32).reshape(1, C2, 1, 1)
    out2 = jax.block_until_ready(frnorm2d(x2, w2, b2, eps))
    ref2 = frnorm2d_ref(x2, w2, b2, eps)
    assert jnp.allclose(out2, ref2, atol=1e-5, rtol=1e-5)

    # Case 3: chunked two-pass (large-H*W fallback), forced small so it runs here.
    w3 = 1.0 + 0.25 * jnp.arange(C, dtype=jnp.float32).reshape(1, C, 1, 1)
    b3 = -0.1 + 0.05 * jnp.arange(C, dtype=jnp.float32).reshape(1, C, 1, 1)
    out3 = jax.block_until_ready(frnorm2d(x, w3, b3, eps, force_hw_chunk=128))
    ref3 = frnorm2d_ref(x, w3, b3, eps)
    assert jnp.allclose(out3, ref3, atol=1e-5, rtol=1e-5)

    # Case 4: bf16 I/O (f32 reduction, affine pass in bf16).
    x4 = jax.random.normal(k3, (N, C, H, W), dtype=jnp.float32).astype(jnp.bfloat16)
    out4 = jax.block_until_ready(frnorm2d(x4, weight, bias, eps))
    ref4 = frnorm2d_ref(x4, weight, bias, eps)
    assert jnp.allclose(out4.astype(jnp.float32), ref4.astype(jnp.float32),
                        atol=0.1, rtol=0.05)

    print("KERNEL_OK")
</pallas_src>

<mosaic_0001>
module attributes {stable_mosaic.version = 11 : i64} {
  func.func @kernel(%arg0: i32, %arg1: memref<1xf32, #tpu.memory_space<smem>>, %arg2: memref<8x256xf32, #tpu.memory_space<vmem>>, %arg3: memref<8x1xf32, #tpu.memory_space<vmem>>, %arg4: memref<8x1xf32, #tpu.memory_space<vmem>>, %arg5: memref<8x256xf32, #tpu.memory_space<vmem>>) attributes {dimension_semantics = [#tpu.dimension_semantics<parallel>], iteration_bounds = array<i64: 1>, scalar_prefetch = 0 : i64, scratch_operands = 0 : i64, tpu.core_type = #tpu.core_type<tc>, window_params = [{transform_indices = @transform_0, window_bounds = array<i64: 1>}, {transform_indices = @transform_1, window_bounds = array<i64: 8, 256>}, {transform_indices = @transform_2, window_bounds = array<i64: 8, 1>}, {transform_indices = @transform_3, window_bounds = array<i64: 8, 1>}, {transform_indices = @transform_4, window_bounds = array<i64: 8, 256>}]} {
    %c0 = arith.constant 0 : index
    %c0_0 = arith.constant 0 : index
    %0 = vector.load %arg2[%c0, %c0_0] : memref<8x256xf32, #tpu.memory_space<vmem>>, vector<8x256xf32>
    %1 = arith.mulf %0, %0 : vector<8x256xf32>
    %cst = arith.constant dense<0.000000e+00> : vector<8xf32>
    %2 = vector.multi_reduction <add>, %1, %cst [1] : vector<8x256xf32> to vector<8xf32>
    %3 = vector.shape_cast %2 : vector<8xf32> to vector<8x1xf32>
    %cst_1 = arith.constant 3.906250e-03 : f32
    %4 = vector.broadcast %cst_1 : f32 to vector<8x1xf32>
    %5 = arith.mulf %3, %4 : vector<8x1xf32>
    %c0_2 = arith.constant 0 : index
    %c0_3 = arith.constant 0 : index
    %6 = vector.load %arg3[%c0_2, %c0_3] : memref<8x1xf32, #tpu.memory_space<vmem>>, vector<8x1xf32>
    %c0_4 = arith.constant 0 : index
    %7 = memref.load %arg1[%c0_4] : memref<1xf32, #tpu.memory_space<smem>>
    %8 = vector.broadcast %7 : f32 to vector<8x1xf32>
    %9 = arith.addf %5, %8 : vector<8x1xf32>
    %10 = math.rsqrt %9 : vector<8x1xf32>
    %11 = arith.mulf %6, %10 : vector<8x1xf32>
    %12 = vector.broadcast %11 : vector<8x1xf32> to vector<8x256xf32>
    %13 = arith.mulf %0, %12 : vector<8x256xf32>
    %c0_5 = arith.constant 0 : index
    %c0_6 = arith.constant 0 : index
    %14 = vector.load %arg4[%c0_5, %c0_6] : memref<8x1xf32, #tpu.memory_space<vmem>>, vector<8x1xf32>
    %15 = vector.broadcast %14 : vector<8x1xf32> to vector<8x256xf32>
    %16 = arith.addf %13, %15 : vector<8x256xf32>
    %c0_7 = arith.constant 0 : index
    %c0_8 = arith.constant 0 : index
    %17 = vector.load %arg5[%c0_7, %c0_8] : memref<8x256xf32, #tpu.memory_space<vmem>>, vector<8x256xf32>
    tpu.vector_store %arg5[%c0_7, %c0_8], %16 {strides = array<i32>} : memref<8x256xf32, #tpu.memory_space<vmem>>, vector<8x256xf32>,
    return
  }
  func.func @transform_0(%arg0: i32) -> i32 {
    %c0_i32 = arith.constant 0 : i32
    %c0_i32_0 = arith.constant 0 : i32
    return %c0_i32 : i32
  }
  func.func @transform_1(%arg0: i32) -> (i32, i32) {
    %c0_i32 = arith.constant 0 : i32
    %c0_i32_0 = arith.constant 0 : i32
    return %arg0, %c0_i32 : i32, i32
  }
  func.func @transform_2(%arg0: i32) -> (i32, i32) {
    %c0_i32 = arith.constant 0 : i32
    %c0_i32_0 = arith.constant 0 : i32
    return %arg0, %c0_i32 : i32, i32
  }
  func.func @transform_3(%arg0: i32) -> (i32, i32) {
    %c0_i32 = arith.constant 0 : i32
    %c0_i32_0 = arith.constant 0 : i32
    return %arg0, %c0_i32 : i32, i32
  }
  func.func @transform_4(%arg0: i32) -> (i32, i32) {
    %c0_i32 = arith.constant 0 : i32
    %c0_i32_0 = arith.constant 0 : i32
    return %arg0, %c0_i32 : i32, i32
  }
}

</mosaic_0001>

<llo_original>
// kernel: tpu_custom_call.1
$region0: #{tpu_custom_call.1}
  #allocation0 [shape = 'u32[]', space=smem, size = 0x4, offset = 0x4, fixed_abs, tag = 'smem constant byte address 0x4 - core index']
  #allocation1 [shape = 'u32[144,128]{1,0:T(1,128)}', space=vmem, size = 0x12000, scoped, tag = 'internal scratch']
  #allocation2 [shape = 'f32[1]{0:T(128)S(6)}', space=smem, size = 0x200, scoped, tag = 'scoped memory for tpu_custom_call.1']
  %s0 = inlined_call_operand.<no memory space> [shape: f32[1], index: 0, kind: input, shape index: {}]
  %s1 = inlined_call_operand.vmem [shape: f32[8,256], index: 1, kind: input, shape index: {}]
  %s2 = inlined_call_operand.vmem [shape: f32[8,1], index: 2, kind: input, shape index: {}]
  %s3 = inlined_call_operand.vmem [shape: f32[8,1], index: 3, kind: input, shape index: {}]
  %s4 = inlined_call_operand.hbm [shape: f32[8,256], index: 4, kind: output, shape index: {}]
  %s5 = sld [smem:[#allocation0]]
  $region26: #{tpu_custom_call.1} parent=0
    _
  %s7 = ssub.s32 1, %s5
  %s8 = scalar_select 0, %s7, %s5
  %9 = sst [smem:[#allocation2]] %s0
  $region1: #{tpu_custom_call.1} parent=0
    #allocation3 [shape = 'u8[8192]{0}', space=vmem, size = 0x2000, scoped, tag = 'output window, operand 0, single buffered']
    #allocation4 [shape = 's32[1]{0}', space=sflag, size = 0x4, scoped, tag = 'scoped memory for tpu_custom_call.1']
    %10 = vsyncpa [#allocation4], 0
    // Predicated region
    $region2: #{tpu_custom_call.1} parent=1 // pred_check
      _
    $region3: #{tpu_custom_call.1} parent=1 // pred_check_branch
      %12 = sbr.rel (0) target = $region5
    $region4: #{tpu_custom_call.1} parent=1 // pred_region
      _
    $region5: #{tpu_custom_call.1} parent=1 // pred_fallthru
      _
    // Predicated region
    $region6: #{tpu_custom_call.1} parent=1 // pred_check
      _
    $region7: #{tpu_custom_call.1} parent=1 // pred_check_branch
      %14 = sbr.rel (0) target = $region9
    $region8: #{tpu_custom_call.1} parent=1 // pred_region
      _
    $region9: #{tpu_custom_call.1} parent=1 // pred_fallthru
      _
    // Predicated region
    $region10: #{tpu_custom_call.1} parent=1 // pred_check
      _
    $region11: #{tpu_custom_call.1} parent=1 // pred_check_branch
      %16 = sbr.rel (0) target = $region13
    $region12: #{tpu_custom_call.1} parent=1 // pred_region
      _
    $region13: #{tpu_custom_call.1} parent=1 // pred_fallthru
      _
    // Predicated region
    $region14: #{tpu_custom_call.1} parent=1 // pred_check
      _
    $region15: #{tpu_custom_call.1} parent=1 // pred_check_branch
      %18 = sbr.rel (0) target = $region17
    $region16: #{tpu_custom_call.1} parent=1 // pred_region
      _
    $region17: #{tpu_custom_call.1} parent=1 // pred_fallthru
      _
    %v19 = vld [vmem:[%s1] sm:$0xff]
    %v20 = vld [vmem:[%s1 + $0x8] sm:$0xff]
    %v21 = vmul.f32 %v19, %v19
    %v22 = vmul.f32 %v20, %v20
    %v23 = vadd.f32 %v21, %v22
    %24 = vadd.xlane.f32.xlu0 %v23
    %v25 = vpop.xlane.xlu0 %24
    %v26 = vmul.f32 %v25, 0.00390625
    %v27 = vld [vmem:[%s2] sm:$0xff]
    %s28 = sld [smem:[#allocation2]]
    %v29 = vstv %s28
    %v30 = vadd.f32 %v26, %v29
    %v31 = vrsqrt.pop %v30
    %v32 = vmul.f32 %v27, %v31
    %34 = vset.pattern.permute.xlu0 0
    %35 = vperm.xlu0 %34, %v32
    %v36 = vpop.permute.xlu0 %35
    %v38 = vmul.f32 %v19, %v36
    %v39 = vmul.f32 %v20, %v36
    %v40 = vld [vmem:[%s3] sm:$0xff]
    %42 = vset.pattern.permute.xlu0 0
    %43 = vperm.xlu0 %42, %v40
    %v44 = vpop.permute.xlu0 %43
    %v46 = vadd.f32 %v38, %v44
    %v47 = vadd.f32 %v39, %v44
    %48 = vst [vmem:[#allocation3] sm:$0xff] %v46
    %49 = vst [vmem:[#allocation3 + $0x8] sm:$0xff] %v47
    // Predicated region
    $region18: #{tpu_custom_call.1} parent=1 // pred_check
      _
    $region19: #{tpu_custom_call.1} parent=1 // pred_check_branch
      %51 = sbr.rel (0) target = $region21
    $region20: #{tpu_custom_call.1} parent=1 // pred_region
      %s53 = ssub.s32 256, 256
      %54 = vsyncadd [#allocation4], %s53
      %s56 = sshll.u32 [#allocation3], 4
      %s57 = int_to_ptr.vmem [resolvable:$true] %s56
      %59 = dma.vmem_to_hbm [thread:$0]  %s57, 256, %s4, [#allocation4]
    $region21: #{tpu_custom_call.1} parent=1 // pred_fallthru
      _
    // Predicated region
    $region22: #{tpu_custom_call.1} parent=1 // pred_check
      _
    $region23: #{tpu_custom_call.1} parent=1 // pred_check_branch
      %61 = sbr.rel (0) target = $region25
    $region24: #{tpu_custom_call.1} parent=1 // pred_region
      %62 = dma.done [#allocation4], 256
    $region25: #{tpu_custom_call.1} parent=1 // pred_fallthru
      _
    %63 = vsyncpa [#allocation4], 1

</llo_original>
